<compile_context>
chip_gen: v5e
topology: v5e:2x2
jax: 0.10.0
libtpu: 0.0.40
codegen_flags: <defaults>
</compile_context>

<pallas_src>
import jax
import jax.numpy as jnp
from jax import lax
from jax.experimental import pallas as pl
from jax.experimental.pallas import tpu as pltpu


# Row offsets of each weight block inside the packed slab.  All offsets/extents are
# multiples of 16 so bf16 (sublane-packed) ref slices stay tile-aligned.
_W1_OFF, _W1_ROWS = 0, 16        # Linear(6, 64):  real (6, 64)  -> (16, 128)
_W2_OFF, _W2_ROWS = 16, 128      # Linear(64, 30): real (64, 30) -> (128, 128)
_W3_OFF, _W3_ROWS = 144, 128     # Linear(30, 30): real (30, 30) -> (128, 128)
_W45_OFF, _W45_ROWS = 272, 128   # fused Linear(30,30)@Linear(30,4): (30, 4) -> (128, 128)
_SLAB_ROWS = 400
_NUM_CLASSES = 4
_IN_FEATURES = 6
_XPAD = 16                       # x feature dim padded 6 -> 16 (matches the W1 block rows)


def _mlp_kernel(x_ref, w_ref, b_ref, o_ref):
    dt = w_ref.dtype
    x = x_ref[...]                       # (TB, 16) matmul dtype
    b = b_ref[...]                       # (8, 128) f32 (bias adds / ReLU / softmax stay f32)

    # Layer 1: Linear(6, 64) + ReLU.  Zero-padded K/N keep the padded lanes at exactly 0.
    # TODO(synk): K=6 could be 6 VPU broadcast-FMAs instead of an MXU pass; MXU has slack here.
    h = jnp.dot(x, w_ref[_W1_OFF:_W1_OFF + _W1_ROWS, :],
                preferred_element_type=jnp.float32) + b[0:1, :]
    h = jnp.maximum(h, 0.0)

    # Layer 2: Linear(64, 30) + ReLU.
    h = jnp.dot(h.astype(dt), w_ref[_W2_OFF:_W2_OFF + _W2_ROWS, :],
                preferred_element_type=jnp.float32) + b[1:2, :]
    h = jnp.maximum(h, 0.0)

    # Layer 3: Linear(30, 30) + ReLU.
    h = jnp.dot(h.astype(dt), w_ref[_W3_OFF:_W3_OFF + _W3_ROWS, :],
                preferred_element_type=jnp.float32) + b[2:3, :]
    h = jnp.maximum(h, 0.0)

    # Layers 4+5 fused offline: Linear(30,30) (no activation) folded into Linear(30,4), + ReLU.
    logits = jnp.dot(h.astype(dt), w_ref[_W45_OFF:_W45_OFF + _W45_ROWS, :],
                     preferred_element_type=jnp.float32) + b[3:4, :]
    logits = jnp.maximum(logits, 0.0)

    # Softmax over the 4 real class lanes (nn.Softmax legacy dim=1 for 2-D input, applied
    # after the final ReLU, exactly as in the PyTorch Sequential).  Lanes 4..127 are masked
    # to a large negative so exp() contributes 0 and the (TB, 128) output stays lane-dense.
    lane = lax.broadcasted_iota(jnp.int32, logits.shape, 1)
    logits = jnp.where(lane < _NUM_CLASSES, logits, jnp.float32(-1e30))
    m = jnp.max(logits, axis=-1, keepdims=True)
    e = jnp.exp(logits - m)
    denom = jnp.sum(e, axis=-1, keepdims=True)
    r = pl.reciprocal(denom, approx=True)      # EUP vrcp: otherwise-idle slot
    r = r * (2.0 - denom * r)                  # one Newton step -> ~f32 accuracy
    o_ref[...] = (e * r).astype(o_ref.dtype)


def pack_params(params, matmul_dtype=jnp.bfloat16):
    """Fuse the activation-free Linear(30,30)->Linear(30,4) pair and pack all weights into
    one lane-dense slab (matmul dtype) plus one small f32 bias slab."""
    w1, b1, w2, b2, w3, b3, w4, b4, w5, b5 = params
    w45 = w4 @ w5                # (30, 4)
    b45 = b4 @ w5 + b5           # (1, 4)

    def pad_block(w, rows):
        blk = jnp.zeros((rows, 128), jnp.float32)
        return blk.at[: w.shape[0], : w.shape[1]].set(w)

    w_slab = jnp.concatenate(
        [pad_block(w1, _W1_ROWS), pad_block(w2, _W2_ROWS),
         pad_block(w3, _W3_ROWS), pad_block(w45, _W45_ROWS)],
        axis=0).astype(matmul_dtype)

    b_slab = jnp.zeros((8, 128), jnp.float32)
    b_slab = b_slab.at[0, :64].set(b1[0])
    b_slab = b_slab.at[1, :30].set(b2[0])
    b_slab = b_slab.at[2, :30].set(b3[0])
    b_slab = b_slab.at[3, :_NUM_CLASSES].set(b45[0])
    return w_slab, b_slab


def _round_up(n, m):
    return (n + m - 1) // m * m


def mlp_forward(x, packed, *, tb=1024):
    """x: (batch, 6).  packed = pack_params(params, matmul_dtype)."""
    w_slab, b_slab = packed
    batch = x.shape[0]
    # Batch tile: multiple of 16 (bf16 sublane packing); >=512 amortizes the ~0.35us/step
    # grid overhead for real workloads; capped so tiny batches stay a single step.
    tile = min(_round_up(tb, 16), _round_up(batch, 16))
    padded = _round_up(batch, tile)

    # Pad features 6 -> 16 (matches the zero-padded W1 block) and batch -> grid multiple.
    xp = jnp.zeros((padded, _XPAD), w_slab.dtype).at[:batch, :_IN_FEATURES].set(
        x.astype(w_slab.dtype))

    out = pl.pallas_call(
        _mlp_kernel,
        out_shape=jax.ShapeDtypeStruct((padded, 128), jnp.float32),
        grid_spec=pltpu.PrefetchScalarGridSpec(
            num_scalar_prefetch=0,
            grid=(padded // tile,),
            in_specs=[
                pl.BlockSpec((tile, _XPAD), lambda i: (i, 0)),       # x tile (pipelined)
                pl.BlockSpec((_SLAB_ROWS, 128), lambda i: (0, 0)),   # weight slab: VMEM-resident
                pl.BlockSpec((8, 128), lambda i: (0, 0)),            # bias slab: VMEM-resident
            ],
            out_specs=pl.BlockSpec((tile, 128), lambda i: (i, 0)),   # lane-dense output
        ),
        compiler_params=pltpu.CompilerParams(
            dimension_semantics=("parallel",),    # shard batch tiles across v7x's 2 TCs
            vmem_limit_bytes=32 * 1024 * 1024,    # explicit; well within v7x's 64 MiB VMEM
        ),
    )(xp, w_slab, b_slab)
    return out[:batch, :_NUM_CLASSES]


def init_params(key):
    """Deterministic synthetic init.  Weights are (in, out); biases (1, out)."""
    dims = [(6, 64), (64, 30), (30, 30), (30, 30), (30, 4)]
    params = []
    for (fan_in, fan_out) in dims:
        key, kw, kb = jax.random.split(key, 3)
        bound = 1.0 / jnp.sqrt(fan_in)
        w = jax.random.uniform(kw, (fan_in, fan_out), jnp.float32, -bound, bound)
        b = jax.random.uniform(kb, (1, fan_out), jnp.float32, -bound, bound)
        params.extend([w, b])
    return tuple(params)


def reference_forward(x, params):
    (w1, b1, w2, b2, w3, b3, w4, b4, w5, b5) = params
    h = jnp.maximum(x @ w1 + b1, 0.0)
    h = jnp.maximum(h @ w2 + b2, 0.0)
    h = jnp.maximum(h @ w3 + b3, 0.0)
    h = h @ w4 + b4
    logits = jnp.maximum(h @ w5 + b5, 0.0)
    return jax.nn.softmax(logits, axis=-1)


if __name__ == "__main__":
    key = jax.random.PRNGKey(0)
    key, kx = jax.random.split(key)
    batch = 200
    x = jax.random.normal(kx, (batch, 6), jnp.float32)
    params = init_params(key)
    ref = reference_forward(x, params)

    # f32 MXU path (the safe default on v5e, whose VPU/EUP lack bf16) — tight check.
    out_f32 = jax.block_until_ready(mlp_forward(x, pack_params(params, jnp.float32), tb=64))
    assert out_f32.shape == (batch, 4)
    assert jnp.allclose(out_f32, ref, atol=1e-4, rtol=1e-3), "f32 mismatch vs. reference"

    # bf16 MXU path (v6e/v7x: single-pass MXU, half the weight DMA bytes) — looser check.
    out_bf16 = jax.block_until_ready(mlp_forward(x, pack_params(params, jnp.bfloat16), tb=64))
    assert out_bf16.shape == (batch, 4)
    assert jnp.allclose(out_bf16, ref, atol=3e-2, rtol=3e-2), "bf16 mismatch vs. reference"

    print("KERNEL_OK")
</pallas_src>

<mosaic_0001>
module attributes {stable_mosaic.version = 11 : i64} {
  func.func @_mlp_kernel(%arg0: i32, %arg1: memref<64x16xf32, #tpu.memory_space<vmem>>, %arg2: memref<400x128xf32, #tpu.memory_space<vmem>>, %arg3: memref<8x128xf32, #tpu.memory_space<vmem>>, %arg4: memref<64x128xf32, #tpu.memory_space<vmem>>) attributes {dimension_semantics = [#tpu.dimension_semantics<parallel>], iteration_bounds = array<i64: 4>, scalar_prefetch = 0 : i64, scratch_operands = 0 : i64, tpu.core_type = #tpu.core_type<tc>, window_params = [{transform_indices = @transform_0, window_bounds = array<i64: 64, 16>}, {pipeline_mode = #tpu.pipeline_mode<synchronous>, transform_indices = @transform_1, window_bounds = array<i64: 400, 128>}, {pipeline_mode = #tpu.pipeline_mode<synchronous>, transform_indices = @transform_2, window_bounds = array<i64: 8, 128>}, {transform_indices = @transform_3, window_bounds = array<i64: 64, 128>}]} {
    %c0 = arith.constant 0 : index
    %c0_0 = arith.constant 0 : index
    %0 = vector.load %arg1[%c0, %c0_0] : memref<64x16xf32, #tpu.memory_space<vmem>>, vector<64x16xf32>
    %c0_1 = arith.constant 0 : index
    %c0_2 = arith.constant 0 : index
    %1 = vector.load %arg3[%c0_1, %c0_2] : memref<8x128xf32, #tpu.memory_space<vmem>>, vector<8x128xf32>
    %c0_3 = arith.constant 0 : index
    %c0_4 = arith.constant 0 : index
    %2 = vector.load %arg2[%c0_3, %c0_4] : memref<400x128xf32, #tpu.memory_space<vmem>>, vector<16x128xf32>
    %cst = arith.constant dense<0.000000e+00> : vector<64x128xf32>
    %3 = tpu.matmul %0, %2, %cst {dimension_numbers = #tpu.dot_dimension_numbers<[1], [0], [0], [1], [0, 0, 1, 1], [], []>} : vector<64x16xf32>, vector<16x128xf32>, vector<64x128xf32> -> vector<64x128xf32>
    %4 = vector.extract_strided_slice %1 {offsets = [0, 0], sizes = [1, 128], strides = [1, 1]} : vector<8x128xf32> to vector<1x128xf32>
    %5 = vector.broadcast %4 : vector<1x128xf32> to vector<64x128xf32>
    %6 = arith.addf %3, %5 : vector<64x128xf32>
    %cst_5 = arith.constant 0.000000e+00 : f32
    %7 = vector.broadcast %cst_5 : f32 to vector<64x128xf32>
    %8 = arith.maximumf %6, %7 : vector<64x128xf32>
    %c16 = arith.constant 16 : index
    %c0_6 = arith.constant 0 : index
    %9 = vector.load %arg2[%c16, %c0_6] : memref<400x128xf32, #tpu.memory_space<vmem>>, vector<128x128xf32>
    %cst_7 = arith.constant dense<0.000000e+00> : vector<64x128xf32>
    %10 = tpu.matmul %8, %9, %cst_7 {dimension_numbers = #tpu.dot_dimension_numbers<[1], [0], [0], [1], [0, 0, 1, 1], [], []>} : vector<64x128xf32>, vector<128x128xf32>, vector<64x128xf32> -> vector<64x128xf32>
    %11 = vector.extract_strided_slice %1 {offsets = [1, 0], sizes = [1, 128], strides = [1, 1]} : vector<8x128xf32> to vector<1x128xf32>
    %12 = vector.broadcast %11 : vector<1x128xf32> to vector<64x128xf32>
    %13 = arith.addf %10, %12 : vector<64x128xf32>
    %cst_8 = arith.constant 0.000000e+00 : f32
    %14 = vector.broadcast %cst_8 : f32 to vector<64x128xf32>
    %15 = arith.maximumf %13, %14 : vector<64x128xf32>
    %c144 = arith.constant 144 : index
    %c0_9 = arith.constant 0 : index
    %16 = vector.load %arg2[%c144, %c0_9] : memref<400x128xf32, #tpu.memory_space<vmem>>, vector<128x128xf32>
    %cst_10 = arith.constant dense<0.000000e+00> : vector<64x128xf32>
    %17 = tpu.matmul %15, %16, %cst_10 {dimension_numbers = #tpu.dot_dimension_numbers<[1], [0], [0], [1], [0, 0, 1, 1], [], []>} : vector<64x128xf32>, vector<128x128xf32>, vector<64x128xf32> -> vector<64x128xf32>
    %18 = vector.extract_strided_slice %1 {offsets = [2, 0], sizes = [1, 128], strides = [1, 1]} : vector<8x128xf32> to vector<1x128xf32>
    %19 = vector.broadcast %18 : vector<1x128xf32> to vector<64x128xf32>
    %20 = arith.addf %17, %19 : vector<64x128xf32>
    %cst_11 = arith.constant 0.000000e+00 : f32
    %21 = vector.broadcast %cst_11 : f32 to vector<64x128xf32>
    %22 = arith.maximumf %20, %21 : vector<64x128xf32>
    %c272 = arith.constant 272 : index
    %c0_12 = arith.constant 0 : index
    %23 = vector.load %arg2[%c272, %c0_12] : memref<400x128xf32, #tpu.memory_space<vmem>>, vector<128x128xf32>
    %cst_13 = arith.constant dense<0.000000e+00> : vector<64x128xf32>
    %24 = tpu.matmul %22, %23, %cst_13 {dimension_numbers = #tpu.dot_dimension_numbers<[1], [0], [0], [1], [0, 0, 1, 1], [], []>} : vector<64x128xf32>, vector<128x128xf32>, vector<64x128xf32> -> vector<64x128xf32>
    %25 = vector.extract_strided_slice %1 {offsets = [3, 0], sizes = [1, 128], strides = [1, 1]} : vector<8x128xf32> to vector<1x128xf32>
    %26 = vector.broadcast %25 : vector<1x128xf32> to vector<64x128xf32>
    %27 = arith.addf %24, %26 : vector<64x128xf32>
    %cst_14 = arith.constant 0.000000e+00 : f32
    %28 = vector.broadcast %cst_14 : f32 to vector<64x128xf32>
    %29 = arith.maximumf %27, %28 : vector<64x128xf32>
    %30 = tpu.iota {dimensions = array<i32: 1>} : vector<64x128xi32>
    %c4_i32 = arith.constant 4 : i32
    %31 = vector.broadcast %c4_i32 : i32 to vector<64x128xi32>
    %32 = arith.cmpi slt, %30, %31 : vector<64x128xi32>
    %cst_15 = arith.constant -1.000000e+30 : f32
    %33 = vector.broadcast %cst_15 : f32 to vector<64x128xf32>
    %34 = arith.select %32, %29, %33 : vector<64x128xi1>, vector<64x128xf32>
    %cst_16 = arith.constant dense<0xFF800000> : vector<64xf32>
    %35 = vector.multi_reduction <maximumf>, %34, %cst_16 [1] : vector<64x128xf32> to vector<64xf32>
    %36 = vector.shape_cast %35 : vector<64xf32> to vector<64x1xf32>
    %37 = vector.broadcast %36 : vector<64x1xf32> to vector<64x128xf32>
    %38 = arith.subf %34, %37 : vector<64x128xf32>
    %39 = math.exp %38 : vector<64x128xf32>
    %cst_17 = arith.constant dense<0.000000e+00> : vector<64xf32>
    %40 = vector.multi_reduction <add>, %39, %cst_17 [1] : vector<64x128xf32> to vector<64xf32>
    %41 = vector.shape_cast %40 : vector<64xf32> to vector<64x1xf32>
    %42 = tpu.reciprocal %41 {approx = true} : vector<64x1xf32> -> vector<64x1xf32>
    %43 = arith.mulf %41, %42 : vector<64x1xf32>
    %cst_18 = arith.constant 2.000000e+00 : f32
    %44 = vector.broadcast %cst_18 : f32 to vector<64x1xf32>
    %45 = arith.subf %44, %43 : vector<64x1xf32>
    %46 = arith.mulf %42, %45 : vector<64x1xf32>
    %47 = vector.broadcast %46 : vector<64x1xf32> to vector<64x128xf32>
    %48 = arith.mulf %39, %47 : vector<64x128xf32>
    %c0_19 = arith.constant 0 : index
    %c0_20 = arith.constant 0 : index
    %49 = vector.load %arg4[%c0_19, %c0_20] : memref<64x128xf32, #tpu.memory_space<vmem>>, vector<64x128xf32>
    tpu.vector_store %arg4[%c0_19, %c0_20], %48 {strides = array<i32>} : memref<64x128xf32, #tpu.memory_space<vmem>>, vector<64x128xf32>,
    return
  }
  func.func @transform_0(%arg0: i32) -> (i32, i32) {
    %c0_i32 = arith.constant 0 : i32
    %c0_i32_0 = arith.constant 0 : i32
    return %arg0, %c0_i32 : i32, i32
  }
  func.func @transform_1(%arg0: i32) -> (i32, i32) {
    %c0_i32 = arith.constant 0 : i32
    %c0_i32_0 = arith.constant 0 : i32
    %c0_i32_1 = arith.constant 0 : i32
    return %c0_i32, %c0_i32_0 : i32, i32
  }
  func.func @transform_2(%arg0: i32) -> (i32, i32) {
    %c0_i32 = arith.constant 0 : i32
    %c0_i32_0 = arith.constant 0 : i32
    %c0_i32_1 = arith.constant 0 : i32
    return %c0_i32, %c0_i32_0 : i32, i32
  }
  func.func @transform_3(%arg0: i32) -> (i32, i32) {
    %c0_i32 = arith.constant 0 : i32
    %c0_i32_0 = arith.constant 0 : i32
    return %arg0, %c0_i32 : i32, i32
  }
}

</mosaic_0001>

<llo_original>
// kernel: tpu_custom_call.1
$region0: #{tpu_custom_call.1}
  #allocation0 [shape = 'u32[]', space=smem, size = 0x4, offset = 0x4, fixed_abs, tag = 'smem constant byte address 0x4 - core index']
  #allocation1 [shape = 'u32[72,128]{1,0:T(1,128)}', space=vmem, size = 0x9000, scoped, tag = 'internal scratch']
  %s0 = inlined_call_operand.vmem [shape: f32[256,16], index: 0, kind: input, shape index: {}]
  %s1 = inlined_call_operand.hbm [shape: f32[400,128], index: 1, kind: input, shape index: {}]
  %s2 = inlined_call_operand.vmem [shape: f32[8,128], index: 2, kind: input, shape index: {}]
  %s3 = inlined_call_operand.hbm [shape: f32[256,128], index: 3, kind: output, shape index: {}]
  %s4 = sld [smem:[#allocation0]]
  $region49: #{tpu_custom_call.1} parent=0
    _
  %s6 = ssub.s32 1, %s4
  %s7 = scalar_select 0, %s6, %s4
  $region1: #{tpu_custom_call.1} parent=0
    #allocation2 [shape = 'u8[204800]{0}', space=vmem, size = 0x32000, scoped, tag = 'input window, operand 1, single buffered']
    #allocation3 [shape = 's32[2]{0}', space=sflag, size = 0x8, scoped, tag = 'scoped memory for tpu_custom_call.1']
    #allocation4 [shape = 's32[2]{0}', space=sflag, size = 0x8, scoped, tag = 'scoped memory for tpu_custom_call.1']
    #allocation5 [shape = 'u8[65536]{0}', space=vmem, size = 0x10000, scoped, tag = 'output window, operand 0']
    %8 = vsyncpa [#allocation3], 0
    %9 = vsyncpa [#allocation4], 0
    %s10 = scalar_lea.sflag [#allocation4], 1
    %11 = vsyncpa %s10, 0
    loop: start=0, step=1, limit=6
    $region2: #{tpu_custom_call.1} parent=1 // loop_pre_header
      _
    $region3: #{tpu_custom_call.1} parent=1 // loop_header
      %s13 = sphi 0, %s17
      %p14 = scmp.ge.s32.totalorder %s13, 6
      %s23 = sphi 0, %s25
      %s26 = sphi 0, %s23
      %s27 = sphi 0, %s26
      %s43 = sphi 0, %s27
      %s47 = sphi 0, %s47
      %s49 = sphi 0, %s47
      %s50 = sphi 0, %s49
      %s64 = sphi 0, %s50
      %s68 = sphi 0, %s68
      %s70 = sphi 0, %s68
      %s71 = sphi 0, %s70
      %s85 = sphi 0, %s71
      %s91 = sphi 0, %s93
      %s94 = sphi 0, %s91
      %s95 = sphi 0, %s94
      %s111 = sphi 0, %s95
    $region4: #{tpu_custom_call.1} parent=1 // loop_header_branch
      %16 = sbr.rel (%p14) target = $region8
    $region5: #{tpu_custom_call.1} parent=1 // loop_body
      %s18 = ssub.s32 %s13, 1
      %s19 = ssub.s32 %s13, 2
      %s20 = sadd.s32 %s13, 1
      %s21 = ssub.s32 %s13, %s20
      %p22 = scmp.eq.s32.totalorder %s21, 0
      %s24 = sadd.s32 %s23, 1
      %s25 = scalar_select %p22, %s23, %s24
      %p28 = pneg %p22
      %p29 = scmp.eq.s32.totalorder %s13, 3
      %p30 = por %p28, %p29
      %p31 = scmp.ne.s32.totalorder %s23, %s26
      %p32 = scmp.eq.s32.totalorder %s13, 0
      %p33 = por %p31, %p32
      %p34 = scmp.ne.s32.totalorder %s23, %s26
      %p35 = scmp.eq.s32.totalorder %s18, 3
      %p36 = por %p34, %p35
      %p37 = scmp.ne.s32.totalorder %s26, %s27
      %p38 = scmp.eq.s32.totalorder %s18, 0
      %p39 = por %p37, %p38
      %p40 = scmp.ne.s32.totalorder %s26, %s27
      %p41 = scmp.eq.s32.totalorder %s19, 3
      %p42 = por %p40, %p41
      %p44 = scmp.ne.s32.totalorder %s27, %s43
      %p45 = scmp.eq.s32.totalorder %s19, 0
      %p46 = por %p44, %p45
      %s48 = sadd.s32 %s47, 1
      %p51 = scmp.eq.s32.totalorder %s13, 3
      %p52 = scmp.ne.s32.totalorder %s47, %s49
      %p53 = scmp.eq.s32.totalorder %s13, 0
      %p54 = por %p52, %p53
      %p55 = scmp.ne.s32.totalorder %s47, %s49
      %p56 = scmp.eq.s32.totalorder %s18, 3
      %p57 = por %p55, %p56
      %p58 = scmp.ne.s32.totalorder %s49, %s50
      %p59 = scmp.eq.s32.totalorder %s18, 0
      %p60 = por %p58, %p59
      %p61 = scmp.ne.s32.totalorder %s49, %s50
      %p62 = scmp.eq.s32.totalorder %s19, 3
      %p63 = por %p61, %p62
      %p65 = scmp.ne.s32.totalorder %s50, %s64
      %p66 = scmp.eq.s32.totalorder %s19, 0
      %p67 = por %p65, %p66
      %s69 = sadd.s32 %s68, 1
      %p72 = scmp.eq.s32.totalorder %s13, 3
      %p73 = scmp.ne.s32.totalorder %s68, %s70
      %p74 = scmp.eq.s32.totalorder %s13, 0
      %p75 = por %p73, %p74
      %p76 = scmp.ne.s32.totalorder %s68, %s70
      %p77 = scmp.eq.s32.totalorder %s18, 3
      %p78 = por %p76, %p77
      %p79 = scmp.ne.s32.totalorder %s70, %s71
      %p80 = scmp.eq.s32.totalorder %s18, 0
      %p81 = por %p79, %p80
      %p82 = scmp.ne.s32.totalorder %s70, %s71
      %p83 = scmp.eq.s32.totalorder %s19, 3
      %p84 = por %p82, %p83
      %p86 = scmp.ne.s32.totalorder %s71, %s85
      %p87 = scmp.eq.s32.totalorder %s19, 0
      %p88 = por %p86, %p87
      %s89 = ssub.s32 %s13, %s20
      %p90 = scmp.eq.s32.totalorder %s89, 0
      %s92 = sadd.s32 %s91, 1
      %s93 = scalar_select %p90, %s91, %s92
      %p96 = pneg %p90
      %p97 = scmp.eq.s32.totalorder %s13, 3
      %p98 = por %p96, %p97
      %p99 = scmp.ne.s32.totalorder %s91, %s94
      %p100 = scmp.eq.s32.totalorder %s13, 0
      %p101 = por %p99, %p100
      %p102 = scmp.ne.s32.totalorder %s91, %s94
      %p103 = scmp.eq.s32.totalorder %s18, 3
      %p104 = por %p102, %p103
      %p105 = scmp.ne.s32.totalorder %s94, %s95
      %p106 = scmp.eq.s32.totalorder %s18, 0
      %p107 = por %p105, %p106
      %p108 = scmp.ne.s32.totalorder %s94, %s95
      %p109 = scmp.eq.s32.totalorder %s19, 3
      %p110 = por %p108, %p109
      %p112 = scmp.ne.s32.totalorder %s95, %s111
      %p113 = scmp.eq.s32.totalorder %s19, 0
      %p114 = por %p112, %p113
      %p115 = scmp.le.s32.totalorder 1, %s13
      %p116 = scmp.lt.s32.totalorder %s13, 5
      %p117 = pnand %p115, %p116
      %p118 = pneg %p117
      // Predicated region
      $region9: #{tpu_custom_call.1} parent=5 // pred_check
        _
      $region10: #{tpu_custom_call.1} parent=5 // pred_check_branch
        %120 = sbr.rel (%p117) target = $region12
      $region11: #{tpu_custom_call.1} parent=5 // pred_region
        %s121 = ssub.s32 %s13, 1
        // Predicated region
        $region13: #{tpu_custom_call.1} parent=11 // pred_check
          %p122 = pneg %p60
        $region14: #{tpu_custom_call.1} parent=11 // pred_check_branch
          %124 = sbr.rel (%p122) target = $region16
        $region15: #{tpu_custom_call.1} parent=11 // pred_region
          %126 = vsyncadd [#allocation3], 0
          %s127 = sshll.u32 %s1, 4
          %s128 = int_to_ptr.hbm [resolvable:$true] %s127
          %s129 = sshll.u32 [#allocation2], 4
          %s130 = int_to_ptr.vmem [resolvable:$true] %s129
          %135 = dma.hbm_to_vmem [thread:$0]  %s128, 6400, %s130, [#allocation3], 128, 128, 8
        $region16: #{tpu_custom_call.1} parent=11 // pred_fallthru
          _
        // Predicated region
        $region17: #{tpu_custom_call.1} parent=11 // pred_check
          %p136 = pneg %p81
        $region18: #{tpu_custom_call.1} parent=11 // pred_check_branch
          %138 = sbr.rel (%p136) target = $region20
        $region19: #{tpu_custom_call.1} parent=11 // pred_region
          _
        $region20: #{tpu_custom_call.1} parent=11 // pred_fallthru
          _
      $region12: #{tpu_custom_call.1} parent=5 // pred_fallthru
        _
      %p139 = scmp.lt.s32.totalorder %s13, 4
      // Predicated region
      $region21: #{tpu_custom_call.1} parent=5 // pred_check
        %p140 = pneg %p139
      $region22: #{tpu_custom_call.1} parent=5 // pred_check_branch
        %142 = sbr.rel (%p140) target = $region24
      $region23: #{tpu_custom_call.1} parent=5 // pred_region
        // Predicated region
        $region25: #{tpu_custom_call.1} parent=23 // pred_check
          %p143 = pneg %p33
        $region26: #{tpu_custom_call.1} parent=23 // pred_check_branch
          %145 = sbr.rel (%p143) target = $region28
        $region27: #{tpu_custom_call.1} parent=23 // pred_region
          %s146 = smul.u32 8, %s13
          %p147 = scmp.lt.s32.totalorder %s146, 31
          %s148 = scalar_select %p147, %s146, 31
          %s149 = smul.addr %s148, 8
          %s150 = scalar_lea.vmem %s0, %s149
          %s151 = smul.u32 8, %s13
        $region28: #{tpu_custom_call.1} parent=23 // pred_fallthru
          _
      $region24: #{tpu_custom_call.1} parent=5 // pred_fallthru
        _
      %p152 = scmp.le.s32.totalorder 1, %s13
      %p153 = scmp.lt.s32.totalorder %s13, 5
      %p154 = pnand %p152, %p153
      %p155 = pneg %p154
      // Predicated region
      $region29: #{tpu_custom_call.1} parent=5 // pred_check
        _
      $region30: #{tpu_custom_call.1} parent=5 // pred_check_branch
        %157 = sbr.rel (%p154) target = $region32
      $region31: #{tpu_custom_call.1} parent=5 // pred_region
        %s158 = ssub.s32 %s13, 1
        // Predicated region
        $region33: #{tpu_custom_call.1} parent=31 // pred_check
          %p159 = pneg %p60
        $region34: #{tpu_custom_call.1} parent=31 // pred_check_branch
          %161 = sbr.rel (%p159) target = $region36
        $region35: #{tpu_custom_call.1} parent=31 // pred_region
          %163 = dma.done [#allocation3], 6400
        $region36: #{tpu_custom_call.1} parent=31 // pred_fallthru
          _
        %s164 = smul.u32 8, %s18
        %p165 = scmp.lt.s32.totalorder %s164, 31
        %s166 = scalar_select %p165, %s164, 31
        %s167 = smul.addr %s166, 8
        %s168 = scalar_lea.vmem %s0, %s167
        %p169 = pneg %p39
        %p170 = pneg %p36
        %p171 = pneg %p60
        %p172 = pneg %p57
        %p173 = pneg %p81
        %p174 = pneg %p78
        %p175 = pneg %p107
        %p176 = pneg %p104
        %s177 = sand.u32 %s94, 1
        %s178 = scalar_lea.sflag [#allocation4], %s177
        %s179 = sand.u32 %s94, 1
        %s180 = smul.addr %s179, 64
        %s181 = scalar_lea.vmem [#allocation5], %s180
        %s182 = smul.u32 8, %s18
        %p183 = scmp.lt.s32.totalorder %s182, 31
        %s184 = scalar_select %p183, %s182, 31
        %s185 = smul.addr %s184, 8
        %s186 = scalar_lea.vmem %s0, %s185
        %s187 = smul.u32 8, %s18
        %s188 = smul.u32 8, %s18
        %v189 = vld [vmem:[%s186] sm:$0xff]
        %v190 = vld [vmem:[%s186 + $0x8] sm:$0xff]
        %v191 = vld [vmem:[%s186 + $0x10] sm:$0xff]
        %v192 = vld [vmem:[%s186 + $0x18] sm:$0xff]
        %v193 = vld [vmem:[%s186 + $0x20] sm:$0xff]
        %v194 = vld [vmem:[%s186 + $0x28] sm:$0xff]
        %v195 = vld [vmem:[%s186 + $0x30] sm:$0xff]
        %v196 = vld [vmem:[%s186 + $0x38] sm:$0xff]
        %v197 = vld [vmem:[%s2] sm:$0xff]
        %v198 = vld [vmem:[#allocation2] sm:$0xff]
        %v199 = vld [vmem:[#allocation2 + $0x8] sm:$0xff]
        %v200 = vperm.slane %v197, 0
        %vm201 = vcmask 130048
        %v203 = vsel %vm201, %v189, 0
        %v206 = vsel %vm201, %v190, 0
        %v209 = vsel %vm201, %v191, 0
        %v212 = vsel %vm201, %v192, 0
        %v215 = vsel %vm201, %v193, 0
        %v218 = vsel %vm201, %v194, 0
        %v221 = vsel %vm201, %v195, 0
        %v224 = vsel %vm201, %v196, 0
        %226 = vmatpush.msra.mxu0 0.0
        %227 = vmatpush.msra.mxu0 0.0
        %228 = vmatpush.msra.mxu0 0.0
        %229 = vmatpush.msra.mxu0 0.0
        %230 = vmatpush.msra.mxu0 0.0
        %231 = vmatpush.msra.mxu0 0.0
        %232 = vmatpush.msra.mxu0 0.0
        %233 = vmatpush.msra.mxu0 0.0
        %234 = vmatpush.msra.mxu0 0.0
        %235 = vmatpush.msra.mxu0 0.0
        %236 = vmatpush.msra.mxu0 0.0
        %237 = vmatpush.msra.mxu0 0.0
        %238 = vmatpush.msra.mxu0 0.0
        %239 = vmatpush.msra.mxu0 0.0
        %240 = vmatpush.msra.mxu0 %v199
        %241 = vmatpush.msra.mxu0 %v198
        %242 = vmatmul.f32.gmra.mxu0 %v203
        %v243 = vpop.f32.mrf.mxu0
        %v244 = vadd.f32 %v200, %v243
        %245 = vmatmul.f32.gmra.mxu0 %v206
        %v246 = vpop.f32.mrf.mxu0
        %v247 = vadd.f32 %v200, %v246
        %248 = vmatmul.f32.gmra.mxu0 %v209
        %v249 = vpop.f32.mrf.mxu0
        %v250 = vadd.f32 %v200, %v249
        %251 = vmatmul.f32.gmra.mxu0 %v212
        %v252 = vpop.f32.mrf.mxu0
        %v253 = vadd.f32 %v200, %v252
        %254 = vmatmul.f32.gmra.mxu0 %v215
        %v255 = vpop.f32.mrf.mxu0
        %v256 = vadd.f32 %v200, %v255
        %257 = vmatmul.f32.gmra.mxu0 %v218
        %v258 = vpop.f32.mrf.mxu0
        %v259 = vadd.f32 %v200, %v258
        %260 = vmatmul.f32.gmra.mxu0 %v221
        %v261 = vpop.f32.mrf.mxu0
        %v262 = vadd.f32 %v200, %v261
        %263 = vmatmul.f32.gmra.mxu0 %v224
        %v264 = vpop.f32.mrf.mxu0
        %v265 = vadd.f32 %v200, %v264
        %266 = vdwg.mxu0
        %v267 = vmax.f32 %v244, 0.0
        %v268 = vmax.f32 %v247, 0.0
        %v269 = vmax.f32 %v250, 0.0
        %v270 = vmax.f32 %v253, 0.0
        %v271 = vmax.f32 %v256, 0.0
        %v272 = vmax.f32 %v259, 0.0
        %v273 = vmax.f32 %v262, 0.0
        %v274 = vmax.f32 %v265, 0.0
        %v275 = vld [vmem:[#allocation2 + $0x10] sm:$0xff]
        %v276 = vld [vmem:[#allocation2 + $0x18] sm:$0xff]
        %v277 = vld [vmem:[#allocation2 + $0x20] sm:$0xff]
        %v278 = vld [vmem:[#allocation2 + $0x28] sm:$0xff]
        %v279 = vld [vmem:[#allocation2 + $0x30] sm:$0xff]
        %v280 = vld [vmem:[#allocation2 + $0x38] sm:$0xff]
        %v281 = vld [vmem:[#allocation2 + $0x40] sm:$0xff]
        %v282 = vld [vmem:[#allocation2 + $0x48] sm:$0xff]
        %v283 = vld [vmem:[#allocation2 + $0x50] sm:$0xff]
        %v284 = vld [vmem:[#allocation2 + $0x58] sm:$0xff]
        %v285 = vld [vmem:[#allocation2 + $0x60] sm:$0xff]
        %v286 = vld [vmem:[#allocation2 + $0x68] sm:$0xff]
        %v287 = vld [vmem:[#allocation2 + $0x70] sm:$0xff]
        %v288 = vld [vmem:[#allocation2 + $0x78] sm:$0xff]
        %v289 = vld [vmem:[#allocation2 + $0x80] sm:$0xff]
        %v290 = vld [vmem:[#allocation2 + $0x88] sm:$0xff]
        %v291 = vperm.slane %v197, 1
        %292 = vmatpush.msra.mxu0 %v290
        %293 = vmatpush.msra.mxu0 %v289
        %294 = vmatpush.msra.mxu0 %v288
        %295 = vmatpush.msra.mxu0 %v287
        %296 = vmatpush.msra.mxu0 %v286
        %297 = vmatpush.msra.mxu0 %v285
        %298 = vmatpush.msra.mxu0 %v284
        %299 = vmatpush.msra.mxu0 %v283
        %300 = vmatpush.msra.mxu0 %v282
        %301 = vmatpush.msra.mxu0 %v281
        %302 = vmatpush.msra.mxu0 %v280
        %303 = vmatpush.msra.mxu0 %v279
        %304 = vmatpush.msra.mxu0 %v278
        %305 = vmatpush.msra.mxu0 %v277
        %306 = vmatpush.msra.mxu0 %v276
        %307 = vmatpush.msra.mxu0 %v275
        %308 = vmatmul.f32.gmra.mxu0 %v267
        %v309 = vpop.f32.mrf.mxu0
        %v310 = vadd.f32 %v291, %v309
        %311 = vmatmul.f32.gmra.mxu0 %v268
        %v312 = vpop.f32.mrf.mxu0
        %v313 = vadd.f32 %v291, %v312
        %314 = vmatmul.f32.gmra.mxu0 %v269
        %v315 = vpop.f32.mrf.mxu0
        %v316 = vadd.f32 %v291, %v315
        %317 = vmatmul.f32.gmra.mxu0 %v270
        %v318 = vpop.f32.mrf.mxu0
        %v319 = vadd.f32 %v291, %v318
        %320 = vmatmul.f32.gmra.mxu0 %v271
        %v321 = vpop.f32.mrf.mxu0
        %v322 = vadd.f32 %v291, %v321
        %323 = vmatmul.f32.gmra.mxu0 %v272
        %v324 = vpop.f32.mrf.mxu0
        %v325 = vadd.f32 %v291, %v324
        %326 = vmatmul.f32.gmra.mxu0 %v273
        %v327 = vpop.f32.mrf.mxu0
        %v328 = vadd.f32 %v291, %v327
        %329 = vmatmul.f32.gmra.mxu0 %v274
        %v330 = vpop.f32.mrf.mxu0
        %v331 = vadd.f32 %v291, %v330
        %332 = vdwg.mxu0
        %v333 = vmax.f32 %v310, 0.0
        %v334 = vmax.f32 %v313, 0.0
        %v335 = vmax.f32 %v316, 0.0
        %v336 = vmax.f32 %v319, 0.0
        %v337 = vmax.f32 %v322, 0.0
        %v338 = vmax.f32 %v325, 0.0
        %v339 = vmax.f32 %v328, 0.0
        %v340 = vmax.f32 %v331, 0.0
        %v341 = vld [vmem:[#allocation2 + $0x90] sm:$0xff]
        %v342 = vld [vmem:[#allocation2 + $0x98] sm:$0xff]
        %v343 = vld [vmem:[#allocation2 + $0xa0] sm:$0xff]
        %v344 = vld [vmem:[#allocation2 + $0xa8] sm:$0xff]
        %v345 = vld [vmem:[#allocation2 + $0xb0] sm:$0xff]
        %v346 = vld [vmem:[#allocation2 + $0xb8] sm:$0xff]
        %v347 = vld [vmem:[#allocation2 + $0xc0] sm:$0xff]
        %v348 = vld [vmem:[#allocation2 + $0xc8] sm:$0xff]
        %v349 = vld [vmem:[#allocation2 + $0xd0] sm:$0xff]
        %v350 = vld [vmem:[#allocation2 + $0xd8] sm:$0xff]
        %v351 = vld [vmem:[#allocation2 + $0xe0] sm:$0xff]
        %v352 = vld [vmem:[#allocation2 + $0xe8] sm:$0xff]
        %v353 = vld [vmem:[#allocation2 + $0xf0] sm:$0xff]
        %v354 = vld [vmem:[#allocation2 + $0xf8] sm:$0xff]
        %v355 = vld [vmem:[#allocation2 + $0x100] sm:$0xff]
        %v356 = vld [vmem:[#allocation2 + $0x108] sm:$0xff]
        %v357 = vperm.slane %v197, 2
        %358 = vmatpush.msra.mxu0 %v356
        %359 = vmatpush.msra.mxu0 %v355
        %360 = vmatpush.msra.mxu0 %v354
        %361 = vmatpush.msra.mxu0 %v353
        %362 = vmatpush.msra.mxu0 %v352
        %363 = vmatpush.msra.mxu0 %v351
        %364 = vmatpush.msra.mxu0 %v350
        %365 = vmatpush.msra.mxu0 %v349
        %366 = vmatpush.msra.mxu0 %v348
        %367 = vmatpush.msra.mxu0 %v347
        %368 = vmatpush.msra.mxu0 %v346
        %369 = vmatpush.msra.mxu0 %v345
        %370 = vmatpush.msra.mxu0 %v344
        %371 = vmatpush.msra.mxu0 %v343
        %372 = vmatpush.msra.mxu0 %v342
        %373 = vmatpush.msra.mxu0 %v341
        %374 = vmatmul.f32.gmra.mxu0 %v333
        %v375 = vpop.f32.mrf.mxu0
        %v376 = vadd.f32 %v357, %v375
        %377 = vmatmul.f32.gmra.mxu0 %v334
        %v378 = vpop.f32.mrf.mxu0
        %v379 = vadd.f32 %v357, %v378
        %380 = vmatmul.f32.gmra.mxu0 %v335
        %v381 = vpop.f32.mrf.mxu0
        %v382 = vadd.f32 %v357, %v381
        %383 = vmatmul.f32.gmra.mxu0 %v336
        %v384 = vpop.f32.mrf.mxu0
        %v385 = vadd.f32 %v357, %v384
        %386 = vmatmul.f32.gmra.mxu0 %v337
        %v387 = vpop.f32.mrf.mxu0
        %v388 = vadd.f32 %v357, %v387
        %389 = vmatmul.f32.gmra.mxu0 %v338
        %v390 = vpop.f32.mrf.mxu0
        %v391 = vadd.f32 %v357, %v390
        %392 = vmatmul.f32.gmra.mxu0 %v339
        %v393 = vpop.f32.mrf.mxu0
        %v394 = vadd.f32 %v357, %v393
        %395 = vmatmul.f32.gmra.mxu0 %v340
        %v396 = vpop.f32.mrf.mxu0
        %v397 = vadd.f32 %v357, %v396
        %398 = vdwg.mxu0
        %v399 = vmax.f32 %v376, 0.0
        %v400 = vmax.f32 %v379, 0.0
        %v401 = vmax.f32 %v382, 0.0
        %v402 = vmax.f32 %v385, 0.0
        %v403 = vmax.f32 %v388, 0.0
        %v404 = vmax.f32 %v391, 0.0
        %v405 = vmax.f32 %v394, 0.0
        %v406 = vmax.f32 %v397, 0.0
        %v407 = vld [vmem:[#allocation2 + $0x110] sm:$0xff]
        %v408 = vld [vmem:[#allocation2 + $0x118] sm:$0xff]
        %v409 = vld [vmem:[#allocation2 + $0x120] sm:$0xff]
        %v410 = vld [vmem:[#allocation2 + $0x128] sm:$0xff]
        %v411 = vld [vmem:[#allocation2 + $0x130] sm:$0xff]
        %v412 = vld [vmem:[#allocation2 + $0x138] sm:$0xff]
        %v413 = vld [vmem:[#allocation2 + $0x140] sm:$0xff]
        %v414 = vld [vmem:[#allocation2 + $0x148] sm:$0xff]
        %v415 = vld [vmem:[#allocation2 + $0x150] sm:$0xff]
        %v416 = vld [vmem:[#allocation2 + $0x158] sm:$0xff]
        %v417 = vld [vmem:[#allocation2 + $0x160] sm:$0xff]
        %v418 = vld [vmem:[#allocation2 + $0x168] sm:$0xff]
        %v419 = vld [vmem:[#allocation2 + $0x170] sm:$0xff]
        %v420 = vld [vmem:[#allocation2 + $0x178] sm:$0xff]
        %v421 = vld [vmem:[#allocation2 + $0x180] sm:$0xff]
        %v422 = vld [vmem:[#allocation2 + $0x188] sm:$0xff]
        %v423 = vperm.slane %v197, 3
        %424 = vmatpush.msra.mxu0 %v422
        %425 = vmatpush.msra.mxu0 %v421
        %426 = vmatpush.msra.mxu0 %v420
        %427 = vmatpush.msra.mxu0 %v419
        %428 = vmatpush.msra.mxu0 %v418
        %429 = vmatpush.msra.mxu0 %v417
        %430 = vmatpush.msra.mxu0 %v416
        %431 = vmatpush.msra.mxu0 %v415
        %432 = vmatpush.msra.mxu0 %v414
        %433 = vmatpush.msra.mxu0 %v413
        %434 = vmatpush.msra.mxu0 %v412
        %435 = vmatpush.msra.mxu0 %v411
        %436 = vmatpush.msra.mxu0 %v410
        %437 = vmatpush.msra.mxu0 %v409
        %438 = vmatpush.msra.mxu0 %v408
        %439 = vmatpush.msra.mxu0 %v407
        %440 = vmatmul.f32.gmra.mxu0 %v399
        %v441 = vpop.f32.mrf.mxu0
        %v442 = vadd.f32 %v423, %v441
        %443 = vmatmul.f32.gmra.mxu0 %v400
        %v444 = vpop.f32.mrf.mxu0
        %v445 = vadd.f32 %v423, %v444
        %446 = vmatmul.f32.gmra.mxu0 %v401
        %v447 = vpop.f32.mrf.mxu0
        %v448 = vadd.f32 %v423, %v447
        %449 = vmatmul.f32.gmra.mxu0 %v402
        %v450 = vpop.f32.mrf.mxu0
        %v451 = vadd.f32 %v423, %v450
        %452 = vmatmul.f32.gmra.mxu0 %v403
        %v453 = vpop.f32.mrf.mxu0
        %v454 = vadd.f32 %v423, %v453
        %455 = vmatmul.f32.gmra.mxu0 %v404
        %v456 = vpop.f32.mrf.mxu0
        %v457 = vadd.f32 %v423, %v456
        %458 = vmatmul.f32.gmra.mxu0 %v405
        %v459 = vpop.f32.mrf.mxu0
        %v460 = vadd.f32 %v423, %v459
        %461 = vmatmul.f32.gmra.mxu0 %v406
        %v462 = vpop.f32.mrf.mxu0
        %v463 = vadd.f32 %v423, %v462
        %464 = vdwg.mxu0
        %v465 = vmax.f32 %v442, 0.0
        %v466 = vmax.f32 %v445, 0.0
        %v467 = vmax.f32 %v448, 0.0
        %v468 = vmax.f32 %v451, 0.0
        %v469 = vmax.f32 %v454, 0.0
        %v470 = vmax.f32 %v457, 0.0
        %v471 = vmax.f32 %v460, 0.0
        %v472 = vmax.f32 %v463, 0.0
        %v473 = vlaneseq
        %v474 = vand.u32 %v473, 127
        %vm475 = vcmp.lt.s32.totalorder %v474, 4
        %v476 = vsel %vm475, %v465, -1e+30
        %v477 = vsel %vm475, %v466, -1e+30
        %v478 = vsel %vm475, %v467, -1e+30
        %v479 = vsel %vm475, %v468, -1e+30
        %v480 = vsel %vm475, %v469, -1e+30
        %v481 = vsel %vm475, %v470, -1e+30
        %v482 = vsel %vm475, %v471, -1e+30
        %v483 = vsel %vm475, %v472, -1e+30
        %484 = vmax.xlane.f32.xlu0 %v476
        %v485 = vpop.xlane.xlu0 %484
        %486 = vmax.xlane.f32.xlu0 %v477
        %v487 = vpop.xlane.xlu0 %486
        %488 = vmax.xlane.f32.xlu0 %v478
        %v489 = vpop.xlane.xlu0 %488
        %490 = vmax.xlane.f32.xlu0 %v479
        %v491 = vpop.xlane.xlu0 %490
        %492 = vmax.xlane.f32.xlu0 %v480
        %v493 = vpop.xlane.xlu0 %492
        %494 = vmax.xlane.f32.xlu0 %v481
        %v495 = vpop.xlane.xlu0 %494
        %496 = vmax.xlane.f32.xlu0 %v482
        %v497 = vpop.xlane.xlu0 %496
        %498 = vmax.xlane.f32.xlu0 %v483
        %v499 = vpop.xlane.xlu0 %498
        %v500 = vsub.f32 %v476, %v485
        %v501 = vsub.f32 %v477, %v487
        %v502 = vsub.f32 %v478, %v489
        %v503 = vsub.f32 %v479, %v491
        %v504 = vsub.f32 %v480, %v493
        %v505 = vsub.f32 %v481, %v495
        %v506 = vsub.f32 %v482, %v497
        %v507 = vsub.f32 %v483, %v499
        %v508 = vmul.f32 %v500, 1.442695
        %v509 = vpow.pop %v508
        %v510 = vmul.f32 %v501, 1.442695
        %v511 = vpow.pop %v510
        %v512 = vmul.f32 %v502, 1.442695
        %v513 = vpow.pop %v512
        %v514 = vmul.f32 %v503, 1.442695
        %v515 = vpow.pop %v514
        %v516 = vmul.f32 %v504, 1.442695
        %v517 = vpow.pop %v516
        %v518 = vmul.f32 %v505, 1.442695
        %v519 = vpow.pop %v518
        %v520 = vmul.f32 %v506, 1.442695
        %v521 = vpow.pop %v520
        %v522 = vmul.f32 %v507, 1.442695
        %v523 = vpow.pop %v522
        %524 = vadd.xlane.f32.xlu0 %v509
        %v525 = vpop.xlane.xlu0 %524
        %526 = vadd.xlane.f32.xlu0 %v511
        %v527 = vpop.xlane.xlu0 %526
        %528 = vadd.xlane.f32.xlu0 %v513
        %v529 = vpop.xlane.xlu0 %528
        %530 = vadd.xlane.f32.xlu0 %v515
        %v531 = vpop.xlane.xlu0 %530
        %532 = vadd.xlane.f32.xlu0 %v517
        %v533 = vpop.xlane.xlu0 %532
        %534 = vadd.xlane.f32.xlu0 %v519
        %v535 = vpop.xlane.xlu0 %534
        %536 = vadd.xlane.f32.xlu0 %v521
        %v537 = vpop.xlane.xlu0 %536
        %538 = vadd.xlane.f32.xlu0 %v523
        %v539 = vpop.xlane.xlu0 %538
        %v540 = vrcp.pop %v525
        %v541 = vrcp.pop %v527
        %v542 = vrcp.pop %v529
        %v543 = vrcp.pop %v531
        %v544 = vrcp.pop %v533
        %v545 = vrcp.pop %v535
        %v546 = vrcp.pop %v537
        %v547 = vrcp.pop %v539
        %v548 = vmul.f32 %v525, %v540
        %v549 = vmul.f32 %v527, %v541
        %v550 = vmul.f32 %v529, %v542
        %v551 = vmul.f32 %v531, %v543
        %v552 = vmul.f32 %v533, %v544
        %v553 = vmul.f32 %v535, %v545
        %v554 = vmul.f32 %v537, %v546
        %v555 = vmul.f32 %v539, %v547
        %v556 = vsub.f32 2.0, %v548
        %v557 = vsub.f32 2.0, %v549
        %v558 = vsub.f32 2.0, %v550
        %v559 = vsub.f32 2.0, %v551
        %v560 = vsub.f32 2.0, %v552
        %v561 = vsub.f32 2.0, %v553
        %v562 = vsub.f32 2.0, %v554
        %v563 = vsub.f32 2.0, %v555
        %v564 = vmul.f32 %v540, %v556
        %v565 = vmul.f32 %v541, %v557
        %v566 = vmul.f32 %v542, %v558
        %v567 = vmul.f32 %v543, %v559
        %v568 = vmul.f32 %v544, %v560
        %v569 = vmul.f32 %v545, %v561
        %v570 = vmul.f32 %v546, %v562
        %v571 = vmul.f32 %v547, %v563
        %v572 = vmul.f32 %v509, %v564
        %v573 = vmul.f32 %v511, %v565
        %v574 = vmul.f32 %v513, %v566
        %v575 = vmul.f32 %v515, %v567
        %v576 = vmul.f32 %v517, %v568
        %v577 = vmul.f32 %v519, %v569
        %v578 = vmul.f32 %v521, %v570
        %v579 = vmul.f32 %v523, %v571
        %580 = vst [vmem:[%s181] sm:$0xff] %v572
        %581 = vst [vmem:[%s181 + $0x8] sm:$0xff] %v573
        %582 = vst [vmem:[%s181 + $0x10] sm:$0xff] %v574
        %583 = vst [vmem:[%s181 + $0x18] sm:$0xff] %v575
        %584 = vst [vmem:[%s181 + $0x20] sm:$0xff] %v576
        %585 = vst [vmem:[%s181 + $0x28] sm:$0xff] %v577
        %586 = vst [vmem:[%s181 + $0x30] sm:$0xff] %v578
        %587 = vst [vmem:[%s181 + $0x38] sm:$0xff] %v579
        %s588 = sand.u32 %s94, 1
        %s589 = scalar_lea.sflag [#allocation4], %s588
        %s590 = sand.u32 %s94, 1
        %s591 = smul.addr %s590, 64
        %s592 = scalar_lea.vmem [#allocation5], %s591
        // Predicated region
        $region37: #{tpu_custom_call.1} parent=31 // pred_check
          %p593 = pneg %p104
        $region38: #{tpu_custom_call.1} parent=31 // pred_check_branch
          %595 = sbr.rel (%p593) target = $region40
        $region39: #{tpu_custom_call.1} parent=31 // pred_region
          %s596 = smul.u32 8, %s18
          %598 = vsyncadd %s589, 0
          %s599 = smul.addr %s596, 8
          %s600 = scalar_lea.hbm %s3, %s599
          %s601 = sshll.u32 %s592, 4
          %s602 = int_to_ptr.vmem [resolvable:$true] %s601
          %s603 = sshll.u32 %s600, 4
          %s604 = int_to_ptr.hbm [resolvable:$true] %s603
          %609 = dma.vmem_to_hbm [thread:$0]  %s602, 1024, %s604, %s589, 128, 128, 8
        $region40: #{tpu_custom_call.1} parent=31 // pred_fallthru
          _
      $region32: #{tpu_custom_call.1} parent=5 // pred_fallthru
        _
      %p610 = scmp.le.s32.totalorder 2, %s13
      // Predicated region
      $region41: #{tpu_custom_call.1} parent=5 // pred_check
        %p611 = pneg %p610
      $region42: #{tpu_custom_call.1} parent=5 // pred_check_branch
        %613 = sbr.rel (%p611) target = $region44
      $region43: #{tpu_custom_call.1} parent=5 // pred_region
        %s614 = ssub.s32 %s13, 2
        // Predicated region
        $region45: #{tpu_custom_call.1} parent=43 // pred_check
          %p615 = pneg %p110
        $region46: #{tpu_custom_call.1} parent=43 // pred_check_branch
          %617 = sbr.rel (%p615) target = $region48
        $region47: #{tpu_custom_call.1} parent=43 // pred_region
          %s618 = sand.u32 %s95, 1
          %s619 = scalar_lea.sflag [#allocation4], %s618
          %s620 = sand.u32 %s95, 1
          %s621 = smul.addr %s620, 64
          %s622 = scalar_lea.vmem [#allocation5], %s621
          %624 = dma.done %s619, 1024
        $region48: #{tpu_custom_call.1} parent=43 // pred_fallthru
          _
      $region44: #{tpu_custom_call.1} parent=5 // pred_fallthru
        _
    $region6: #{tpu_custom_call.1} parent=1 // loop_footer
      %s17 = sadd.s32 1, %s13
    $region7: #{tpu_custom_call.1} parent=1 // loop_footer_branch
      %12 = sbr.rel target = $region3
    $region8: #{tpu_custom_call.1} parent=1 // loop_exit
      _
    %625 = vsyncpa [#allocation3], 1
    %s626 = scalar_lea.sflag [#allocation3], 1
    %627 = vsyncpa %s626, 1
    %628 = vsyncpa [#allocation4], 1
    %s629 = scalar_lea.sflag [#allocation4], 1
    %630 = vsyncpa %s629, 1

</llo_original>
